<compile_context>
chip_gen: v5e
topology: v5e:2x2
jax: 0.10.0
libtpu: 0.0.40
codegen_flags: <defaults>
</compile_context>

<pallas_src>
import functools
from math import sqrt

import jax
import jax.numpy as jnp
from jax.experimental import pallas as pl
from jax.experimental.pallas import tpu as pltpu


# ---------------------------------------------------------------------------
# helpers
# ---------------------------------------------------------------------------
def _round_up(n, m):
    return ((n + m - 1) // m) * m


def _sigmoid(x):
    # sigmoid(x) == 0.5 * (tanh(x / 2) + 1): one EUP transcendental instead of
    # exp + reciprocal (the sigmoids dominate the EUP slot at small K).
    return 0.5 * jnp.tanh(0.5 * x) + 0.5


def _maybe_layer_norm(gates, gamma_ref, beta_ref, n_real, layer_norm):
    """LayerNorm over the *real* 4H gate entries (padded lanes are zero and
    gamma/beta are zero-padded, so padded lanes stay exactly zero)."""
    if not layer_norm:
        return gates
    inv_n = 1.0 / float(n_real)
    mean = jnp.sum(gates, axis=-1, keepdims=True) * inv_n
    msq = jnp.sum(gates * gates, axis=-1, keepdims=True) * inv_n
    var = msq - mean * mean
    gates = (gates - mean) * jax.lax.rsqrt(var + 1e-5)
    return gates * gamma_ref[...] + beta_ref[...]


def _gates_to_state(gates, c, hp):
    # Gate order (i, f, g, o) matches CustomLSTMCell's chunking of the 4H axis.
    i_g = _sigmoid(gates[:, 0 * hp:1 * hp])
    f_g = _sigmoid(gates[:, 1 * hp:2 * hp])
    g_g = jnp.tanh(gates[:, 2 * hp:3 * hp])
    o_g = _sigmoid(gates[:, 3 * hp:4 * hp])
    c_new = f_g * c + i_g * g_g
    h_new = o_g * jnp.tanh(c_new)
    return h_new, c_new


# ---------------------------------------------------------------------------
# parameter packing (done ONCE, outside any step loop)
# ---------------------------------------------------------------------------
def prepare_params(weight, bias=None, *, input_size, hidden_size,
                   layer_norm=False, ln_gamma=None, ln_beta=None,
                   compute_dtype=jnp.float32):
    """Pack the PyTorch-layout weight (4H, I+H) into a single lane-aligned
    (Ip+Hp, 4*Hp) matrix so the kernel runs one fused matmul.  Gate k occupies
    columns [k*Hp, k*Hp+H); padded rows/columns are zero."""
    I, H = input_size, hidden_size
    weight = jnp.asarray(weight, jnp.float32)
    assert weight.shape == (4 * H, I + H)
    Ip = _round_up(I, 128)
    Hp = _round_up(H, 128)

    def pack_gate_cols(m):                       # (K, 4H) -> (K, 4*Hp)
        k = m.shape[0]
        m = m.reshape(k, 4, H)
        m = jnp.pad(m, ((0, 0), (0, 0), (0, Hp - H)))
        return m.reshape(k, 4 * Hp)

    wx = jnp.pad(pack_gate_cols(weight[:, :I].T), ((0, Ip - I), (0, 0)))   # (Ip, 4Hp)
    wh = jnp.pad(pack_gate_cols(weight[:, I:].T), ((0, Hp - H), (0, 0)))   # (Hp, 4Hp)
    w_packed = jnp.concatenate([wx, wh], axis=0).astype(compute_dtype)     # (Ip+Hp, 4Hp)

    def pack_vec(v):
        v = jnp.asarray(v, jnp.float32).reshape(4, H)
        v = jnp.pad(v, ((0, 0), (0, Hp - H)))
        return v.reshape(1, 4 * Hp)

    b_packed = (pack_vec(bias) if bias is not None
                else jnp.zeros((1, 4 * Hp), jnp.float32))
    if layer_norm:
        gamma_p = pack_vec(ln_gamma if ln_gamma is not None
                           else jnp.ones((4 * H,), jnp.float32))
        beta_p = pack_vec(ln_beta if ln_beta is not None
                          else jnp.zeros((4 * H,), jnp.float32))
    else:
        gamma_p = jnp.zeros((1, 4 * Hp), jnp.float32)
        beta_p = jnp.zeros((1, 4 * Hp), jnp.float32)

    return dict(w=w_packed, b=b_packed, gamma=gamma_p, beta=beta_p,
                input_size=I, hidden_size=H, ip=Ip, hp=Hp,
                layer_norm=layer_norm)


# ---------------------------------------------------------------------------
# single-step cell kernel (matches CustomLSTMCell.forward)
# ---------------------------------------------------------------------------
def _lstm_cell_kernel(x_ref, h_ref, c_ref, w_ref, b_ref, gam_ref, bet_ref,
                      h_out_ref, c_out_ref, xh_sc, *, ip, hp, n_gates,
                      layer_norm):
    # Build [x, h] in a lane-aligned VMEM scratch -> ONE fused matmul.
    xh_sc[:, :ip] = x_ref[...]
    xh_sc[:, ip:] = h_ref[...]
    lhs = xh_sc[...].astype(w_ref.dtype)          # optional bf16 MXU path
    gates = jnp.dot(lhs, w_ref[...], preferred_element_type=jnp.float32)
    gates = gates + b_ref[...]
    gates = _maybe_layer_norm(gates, gam_ref, bet_ref, n_gates, layer_norm)
    h_new, c_new = _gates_to_state(gates, c_ref[...], hp)
    h_out_ref[...] = h_new.astype(h_out_ref.dtype)
    c_out_ref[...] = c_new.astype(c_out_ref.dtype)


def lstm_cell_forward(params, x, states=None, *, batch_tile=128):
    """Pallas equivalent of CustomLSTMCell.forward.  Returns (h, (h, c))."""
    I, H = params["input_size"], params["hidden_size"]
    Ip, Hp = params["ip"], params["hp"]
    Kp = Ip + Hp
    B = x.shape[0]
    bt = min(_round_up(B, 8), _round_up(batch_tile, 8))
    Bp = _round_up(B, bt)

    x_p = jnp.pad(x.astype(jnp.float32), ((0, Bp - B), (0, Ip - I)))
    if states is None:
        h_p = jnp.zeros((Bp, Hp), jnp.float32)
        c_p = jnp.zeros((Bp, Hp), jnp.float32)
    else:
        h, c = states
        h_p = jnp.pad(h.astype(jnp.float32), ((0, Bp - B), (0, Hp - H)))
        c_p = jnp.pad(c.astype(jnp.float32), ((0, Bp - B), (0, Hp - H)))

    kernel = functools.partial(_lstm_cell_kernel, ip=Ip, hp=Hp,
                               n_gates=4 * H, layer_norm=params["layer_norm"])

    h_out, c_out = pl.pallas_call(
        kernel,
        out_shape=(jax.ShapeDtypeStruct((Bp, Hp), jnp.float32),
                   jax.ShapeDtypeStruct((Bp, Hp), jnp.float32)),
        grid=(Bp // bt,),
        in_specs=[pl.BlockSpec((bt, Ip), lambda i: (i, 0)),
                  pl.BlockSpec((bt, Hp), lambda i: (i, 0)),
                  pl.BlockSpec((bt, Hp), lambda i: (i, 0)),
                  pl.BlockSpec((Kp, 4 * Hp), lambda i: (0, 0)),
                  pl.BlockSpec((1, 4 * Hp), lambda i: (0, 0)),
                  pl.BlockSpec((1, 4 * Hp), lambda i: (0, 0)),
                  pl.BlockSpec((1, 4 * Hp), lambda i: (0, 0))],
        out_specs=(pl.BlockSpec((bt, Hp), lambda i: (i, 0)),
                   pl.BlockSpec((bt, Hp), lambda i: (i, 0))),
        scratch_shapes=[pltpu.VMEM((bt, Kp), jnp.float32)],
        compiler_params=pltpu.CompilerParams(
            dimension_semantics=("parallel",)),
    )(x_p, h_p, c_p, params["w"], params["b"], params["gamma"], params["beta"])

    h_new = h_out[:B, :H]
    c_new = c_out[:B, :H]
    return h_new, (h_new, c_new)


# ---------------------------------------------------------------------------
# fused time-loop kernel: T steps in one pallas_call, weights stay in VMEM
# ---------------------------------------------------------------------------
def _lstm_seq_kernel(x_ref, h0_ref, c0_ref, w_ref, b_ref, gam_ref, bet_ref,
                     hs_ref, c_out_ref, xh_sc, h_sc, c_sc, *, ip, hp, n_gates,
                     layer_norm):
    t = pl.program_id(0)

    @pl.when(t == 0)
    def _():
        h_sc[...] = h0_ref[...]
        c_sc[...] = c0_ref[...]

    xh_sc[:, :ip] = x_ref[...]
    xh_sc[:, ip:] = h_sc[...]
    lhs = xh_sc[...].astype(w_ref.dtype)
    gates = jnp.dot(lhs, w_ref[...], preferred_element_type=jnp.float32)
    gates = gates + b_ref[...]
    gates = _maybe_layer_norm(gates, gam_ref, bet_ref, n_gates, layer_norm)
    h_new, c_new = _gates_to_state(gates, c_sc[...], hp)
    h_sc[...] = h_new
    c_sc[...] = c_new
    hs_ref[...] = h_new.astype(hs_ref.dtype)

    @pl.when(t == pl.num_programs(0) - 1)
    def _():
        c_out_ref[...] = c_new.astype(c_out_ref.dtype)


def lstm_sequence_forward(params, xs, states=None):
    """Run the cell over xs of shape (T, B, input_size) inside one kernel.
    Returns (hs, (h_T, c_T)) with hs of shape (T, B, hidden_size)."""
    I, H = params["input_size"], params["hidden_size"]
    Ip, Hp = params["ip"], params["hp"]
    Kp = Ip + Hp
    T, B, _ = xs.shape
    Bp = _round_up(B, 8)

    xs_p = jnp.pad(xs.astype(jnp.float32), ((0, 0), (0, Bp - B), (0, Ip - I)))
    if states is None:
        h0 = jnp.zeros((Bp, Hp), jnp.float32)
        c0 = jnp.zeros((Bp, Hp), jnp.float32)
    else:
        h, c = states
        h0 = jnp.pad(h.astype(jnp.float32), ((0, Bp - B), (0, Hp - H)))
        c0 = jnp.pad(c.astype(jnp.float32), ((0, Bp - B), (0, Hp - H)))

    kernel = functools.partial(_lstm_seq_kernel, ip=Ip, hp=Hp,
                               n_gates=4 * H, layer_norm=params["layer_norm"])

    hs_p, c_p = pl.pallas_call(
        kernel,
        out_shape=(jax.ShapeDtypeStruct((T, Bp, Hp), jnp.float32),
                   jax.ShapeDtypeStruct((Bp, Hp), jnp.float32)),
        grid=(T,),
        in_specs=[pl.BlockSpec((None, Bp, Ip), lambda t: (t, 0, 0)),
                  pl.BlockSpec((Bp, Hp), lambda t: (0, 0)),
                  pl.BlockSpec((Bp, Hp), lambda t: (0, 0)),
                  pl.BlockSpec((Kp, 4 * Hp), lambda t: (0, 0)),   # fetched once
                  pl.BlockSpec((1, 4 * Hp), lambda t: (0, 0)),
                  pl.BlockSpec((1, 4 * Hp), lambda t: (0, 0)),
                  pl.BlockSpec((1, 4 * Hp), lambda t: (0, 0))],
        out_specs=(pl.BlockSpec((None, Bp, Hp), lambda t: (t, 0, 0)),
                   pl.BlockSpec((Bp, Hp), lambda t: (0, 0))),
        scratch_shapes=[pltpu.VMEM((Bp, Kp), jnp.float32),
                        pltpu.VMEM((Bp, Hp), jnp.float32),
                        pltpu.VMEM((Bp, Hp), jnp.float32)],
        compiler_params=pltpu.CompilerParams(
            dimension_semantics=("arbitrary",)),     # recurrence: sequential
    )(xs_p, h0, c0, params["w"], params["b"], params["gamma"], params["beta"])

    hs = hs_p[:, :B, :H]
    return hs, (hs[-1], c_p[:B, :H])


# ---------------------------------------------------------------------------
# pure-JAX reference (direct port of the PyTorch forward) for validation
# ---------------------------------------------------------------------------
def _reference_cell(x, h, c, weight, bias, hidden_size,
                    layer_norm=False, ln_gamma=None, ln_beta=None):
    gates = jnp.concatenate([x, h], axis=1) @ weight.T
    if bias is not None:
        gates = gates + bias
    if layer_norm:
        mean = jnp.mean(gates, axis=-1, keepdims=True)
        var = jnp.mean(jnp.square(gates - mean), axis=-1, keepdims=True)
        gates = (gates - mean) / jnp.sqrt(var + 1e-5)
        gates = gates * ln_gamma + ln_beta
    H = hidden_size
    i = jax.nn.sigmoid(gates[:, 0:H])
    f = jax.nn.sigmoid(gates[:, H:2 * H])
    g = jnp.tanh(gates[:, 2 * H:3 * H])
    o = jax.nn.sigmoid(gates[:, 3 * H:])
    c_new = f * c + i * g
    h_new = o * jnp.tanh(c_new)
    return h_new, c_new


if __name__ == "__main__":
    input_size, hidden_size, batch, seq_len = 16, 32, 8, 6
    key = jax.random.PRNGKey(0)
    k = jax.random.split(key, 8)
    stdv = 1.0 / sqrt(hidden_size)
    weight = jax.random.uniform(k[0], (4 * hidden_size, input_size + hidden_size),
                                minval=-stdv, maxval=stdv, dtype=jnp.float32)
    bias = jax.random.uniform(k[1], (4 * hidden_size,),
                              minval=-stdv, maxval=stdv, dtype=jnp.float32)
    ln_gamma = jax.random.uniform(k[2], (4 * hidden_size,),
                                  minval=-stdv, maxval=stdv, dtype=jnp.float32)
    ln_beta = jax.random.uniform(k[3], (4 * hidden_size,),
                                 minval=-stdv, maxval=stdv, dtype=jnp.float32)
    x = jax.random.normal(k[4], (batch, input_size), dtype=jnp.float32)
    h0 = jax.random.normal(k[5], (batch, hidden_size), dtype=jnp.float32)
    c0 = jax.random.normal(k[6], (batch, hidden_size), dtype=jnp.float32)
    xs = jax.random.normal(k[7], (seq_len, batch, input_size), dtype=jnp.float32)

    # Pack weights once (no per-step transpose).
    params = prepare_params(weight, bias, input_size=input_size,
                            hidden_size=hidden_size)

    # --- single step, given states ---
    h1, (_, c1) = lstm_cell_forward(params, x, (h0, c0))
    jax.block_until_ready((h1, c1))
    h_ref, c_ref = _reference_cell(x, h0, c0, weight, bias, hidden_size)
    assert jnp.allclose(h1, h_ref, atol=1e-4, rtol=1e-4)
    assert jnp.allclose(c1, c_ref, atol=1e-4, rtol=1e-4)

    # --- states=None (zero-initialized) ---
    hz, (_, cz) = lstm_cell_forward(params, x, None)
    z = jnp.zeros((batch, hidden_size), jnp.float32)
    hz_ref, cz_ref = _reference_cell(x, z, z, weight, bias, hidden_size)
    assert jnp.allclose(hz, hz_ref, atol=1e-4, rtol=1e-4)
    assert jnp.allclose(cz, cz_ref, atol=1e-4, rtol=1e-4)

    # --- layer_norm path with affine gamma/beta ---
    params_ln = prepare_params(weight, bias, input_size=input_size,
                               hidden_size=hidden_size, layer_norm=True,
                               ln_gamma=ln_gamma, ln_beta=ln_beta)
    h_ln, (_, c_ln) = lstm_cell_forward(params_ln, x, (h0, c0))
    h_ln_ref, c_ln_ref = _reference_cell(x, h0, c0, weight, bias, hidden_size,
                                         layer_norm=True, ln_gamma=ln_gamma,
                                         ln_beta=ln_beta)
    assert jnp.allclose(h_ln, h_ln_ref, atol=1e-4, rtol=1e-4)
    assert jnp.allclose(c_ln, c_ln_ref, atol=1e-4, rtol=1e-4)

    # --- fused time-loop kernel (weights resident across T steps) ---
    hs, (hT, cT) = lstm_sequence_forward(params, xs, (h0, c0))
    jax.block_until_ready((hs, cT))
    h_r, c_r = h0, c0
    hs_ref = []
    for t in range(seq_len):
        h_r, c_r = _reference_cell(xs[t], h_r, c_r, weight, bias, hidden_size)
        hs_ref.append(h_r)
    hs_ref = jnp.stack(hs_ref)
    assert jnp.allclose(hs, hs_ref, atol=1e-4, rtol=1e-4)
    assert jnp.allclose(hT, hs_ref[-1], atol=1e-4, rtol=1e-4)
    assert jnp.allclose(cT, c_r, atol=1e-4, rtol=1e-4)

    # --- optional bf16 MXU path (f32 accumulation), loose tolerance ---
    params_bf16 = prepare_params(weight, bias, input_size=input_size,
                                 hidden_size=hidden_size,
                                 compute_dtype=jnp.bfloat16)
    h_bf, (_, c_bf) = lstm_cell_forward(params_bf16, x, (h0, c0))
    jax.block_until_ready((h_bf, c_bf))
    assert float(jnp.max(jnp.abs(h_bf - h_ref))) < 1e-1

    print("KERNEL_OK")
</pallas_src>

<mosaic_0001>
module attributes {stable_mosaic.version = 11 : i64} {
  func.func @_lstm_cell_kernel(%arg0: i32, %arg1: memref<8x128xf32, #tpu.memory_space<vmem>>, %arg2: memref<8x128xf32, #tpu.memory_space<vmem>>, %arg3: memref<8x128xf32, #tpu.memory_space<vmem>>, %arg4: memref<256x512xf32, #tpu.memory_space<vmem>>, %arg5: memref<1x512xf32, #tpu.memory_space<vmem>>, %arg6: memref<1x512xf32, #tpu.memory_space<vmem>>, %arg7: memref<1x512xf32, #tpu.memory_space<vmem>>, %arg8: memref<8x128xf32, #tpu.memory_space<vmem>>, %arg9: memref<8x128xf32, #tpu.memory_space<vmem>>, %arg10: memref<8x256xf32, #tpu.memory_space<vmem>>) attributes {dimension_semantics = [#tpu.dimension_semantics<parallel>], iteration_bounds = array<i64: 1>, scalar_prefetch = 0 : i64, scratch_operands = 1 : i64, tpu.core_type = #tpu.core_type<tc>, window_params = [{transform_indices = @transform_0, window_bounds = array<i64: 8, 128>}, {transform_indices = @transform_1, window_bounds = array<i64: 8, 128>}, {transform_indices = @transform_2, window_bounds = array<i64: 8, 128>}, {pipeline_mode = #tpu.pipeline_mode<synchronous>, transform_indices = @transform_3, window_bounds = array<i64: 256, 512>}, {pipeline_mode = #tpu.pipeline_mode<synchronous>, transform_indices = @transform_4, window_bounds = array<i64: 1, 512>}, {pipeline_mode = #tpu.pipeline_mode<synchronous>, transform_indices = @transform_5, window_bounds = array<i64: 1, 512>}, {pipeline_mode = #tpu.pipeline_mode<synchronous>, transform_indices = @transform_6, window_bounds = array<i64: 1, 512>}, {transform_indices = @transform_7, window_bounds = array<i64: 8, 128>}, {transform_indices = @transform_8, window_bounds = array<i64: 8, 128>}]} {
    %c0 = arith.constant 0 : index
    %c0_0 = arith.constant 0 : index
    %0 = vector.load %arg1[%c0, %c0_0] : memref<8x128xf32, #tpu.memory_space<vmem>>, vector<8x128xf32>
    %c0_1 = arith.constant 0 : index
    %c0_2 = arith.constant 0 : index
    %1 = vector.load %arg10[%c0_1, %c0_2] : memref<8x256xf32, #tpu.memory_space<vmem>>, vector<8x128xf32>
    tpu.vector_store %arg10[%c0_1, %c0_2], %0 {strides = array<i32>} : memref<8x256xf32, #tpu.memory_space<vmem>>, vector<8x128xf32>,
    %c0_3 = arith.constant 0 : index
    %c0_4 = arith.constant 0 : index
    %2 = vector.load %arg2[%c0_3, %c0_4] : memref<8x128xf32, #tpu.memory_space<vmem>>, vector<8x128xf32>
    %c0_5 = arith.constant 0 : index
    %c128 = arith.constant 128 : index
    %3 = vector.load %arg10[%c0_5, %c128] : memref<8x256xf32, #tpu.memory_space<vmem>>, vector<8x128xf32>
    tpu.vector_store %arg10[%c0_5, %c128], %2 {strides = array<i32>} : memref<8x256xf32, #tpu.memory_space<vmem>>, vector<8x128xf32>,
    %c0_6 = arith.constant 0 : index
    %c0_7 = arith.constant 0 : index
    %4 = vector.load %arg10[%c0_6, %c0_7] : memref<8x256xf32, #tpu.memory_space<vmem>>, vector<8x256xf32>
    %c0_8 = arith.constant 0 : index
    %c0_9 = arith.constant 0 : index
    %5 = vector.load %arg4[%c0_8, %c0_9] : memref<256x512xf32, #tpu.memory_space<vmem>>, vector<256x512xf32>
    %cst = arith.constant dense<0.000000e+00> : vector<8x512xf32>
    %6 = tpu.matmul %4, %5, %cst {dimension_numbers = #tpu.dot_dimension_numbers<[1], [0], [0], [1], [0, 0, 1, 1], [], []>} : vector<8x256xf32>, vector<256x512xf32>, vector<8x512xf32> -> vector<8x512xf32>
    %c0_10 = arith.constant 0 : index
    %c0_11 = arith.constant 0 : index
    %7 = vector.load %arg5[%c0_10, %c0_11] : memref<1x512xf32, #tpu.memory_space<vmem>>, vector<1x512xf32>
    %8 = vector.broadcast %7 : vector<1x512xf32> to vector<8x512xf32>
    %9 = arith.addf %6, %8 : vector<8x512xf32>
    %c0_12 = arith.constant 0 : index
    %c0_13 = arith.constant 0 : index
    %10 = vector.load %arg3[%c0_12, %c0_13] : memref<8x128xf32, #tpu.memory_space<vmem>>, vector<8x128xf32>
    %11 = vector.extract_strided_slice %9 {offsets = [0, 0], sizes = [8, 128], strides = [1, 1]} : vector<8x512xf32> to vector<8x128xf32>
    %cst_14 = arith.constant 5.000000e-01 : f32
    %12 = vector.broadcast %cst_14 : f32 to vector<8x128xf32>
    %13 = arith.mulf %12, %11 : vector<8x128xf32>
    %14 = math.tanh %13 : vector<8x128xf32>
    %cst_15 = arith.constant 5.000000e-01 : f32
    %15 = vector.broadcast %cst_15 : f32 to vector<8x128xf32>
    %16 = arith.mulf %15, %14 : vector<8x128xf32>
    %cst_16 = arith.constant 5.000000e-01 : f32
    %17 = vector.broadcast %cst_16 : f32 to vector<8x128xf32>
    %18 = arith.addf %16, %17 : vector<8x128xf32>
    %19 = vector.extract_strided_slice %9 {offsets = [0, 128], sizes = [8, 128], strides = [1, 1]} : vector<8x512xf32> to vector<8x128xf32>
    %cst_17 = arith.constant 5.000000e-01 : f32
    %20 = vector.broadcast %cst_17 : f32 to vector<8x128xf32>
    %21 = arith.mulf %20, %19 : vector<8x128xf32>
    %22 = math.tanh %21 : vector<8x128xf32>
    %cst_18 = arith.constant 5.000000e-01 : f32
    %23 = vector.broadcast %cst_18 : f32 to vector<8x128xf32>
    %24 = arith.mulf %23, %22 : vector<8x128xf32>
    %cst_19 = arith.constant 5.000000e-01 : f32
    %25 = vector.broadcast %cst_19 : f32 to vector<8x128xf32>
    %26 = arith.addf %24, %25 : vector<8x128xf32>
    %27 = vector.extract_strided_slice %9 {offsets = [0, 256], sizes = [8, 128], strides = [1, 1]} : vector<8x512xf32> to vector<8x128xf32>
    %28 = math.tanh %27 : vector<8x128xf32>
    %29 = vector.extract_strided_slice %9 {offsets = [0, 384], sizes = [8, 128], strides = [1, 1]} : vector<8x512xf32> to vector<8x128xf32>
    %cst_20 = arith.constant 5.000000e-01 : f32
    %30 = vector.broadcast %cst_20 : f32 to vector<8x128xf32>
    %31 = arith.mulf %30, %29 : vector<8x128xf32>
    %32 = math.tanh %31 : vector<8x128xf32>
    %cst_21 = arith.constant 5.000000e-01 : f32
    %33 = vector.broadcast %cst_21 : f32 to vector<8x128xf32>
    %34 = arith.mulf %33, %32 : vector<8x128xf32>
    %cst_22 = arith.constant 5.000000e-01 : f32
    %35 = vector.broadcast %cst_22 : f32 to vector<8x128xf32>
    %36 = arith.addf %34, %35 : vector<8x128xf32>
    %37 = arith.mulf %26, %10 : vector<8x128xf32>
    %38 = arith.mulf %18, %28 : vector<8x128xf32>
    %39 = arith.addf %37, %38 : vector<8x128xf32>
    %40 = math.tanh %39 : vector<8x128xf32>
    %41 = arith.mulf %36, %40 : vector<8x128xf32>
    %c0_23 = arith.constant 0 : index
    %c0_24 = arith.constant 0 : index
    %42 = vector.load %arg8[%c0_23, %c0_24] : memref<8x128xf32, #tpu.memory_space<vmem>>, vector<8x128xf32>
    tpu.vector_store %arg8[%c0_23, %c0_24], %41 {strides = array<i32>} : memref<8x128xf32, #tpu.memory_space<vmem>>, vector<8x128xf32>,
    %c0_25 = arith.constant 0 : index
    %c0_26 = arith.constant 0 : index
    %43 = vector.load %arg9[%c0_25, %c0_26] : memref<8x128xf32, #tpu.memory_space<vmem>>, vector<8x128xf32>
    tpu.vector_store %arg9[%c0_25, %c0_26], %39 {strides = array<i32>} : memref<8x128xf32, #tpu.memory_space<vmem>>, vector<8x128xf32>,
    return
  }
  func.func @transform_0(%arg0: i32) -> (i32, i32) {
    %c0_i32 = arith.constant 0 : i32
    %c0_i32_0 = arith.constant 0 : i32
    return %arg0, %c0_i32 : i32, i32
  }
  func.func @transform_1(%arg0: i32) -> (i32, i32) {
    %c0_i32 = arith.constant 0 : i32
    %c0_i32_0 = arith.constant 0 : i32
    return %arg0, %c0_i32 : i32, i32
  }
  func.func @transform_2(%arg0: i32) -> (i32, i32) {
    %c0_i32 = arith.constant 0 : i32
    %c0_i32_0 = arith.constant 0 : i32
    return %arg0, %c0_i32 : i32, i32
  }
  func.func @transform_3(%arg0: i32) -> (i32, i32) {
    %c0_i32 = arith.constant 0 : i32
    %c0_i32_0 = arith.constant 0 : i32
    %c0_i32_1 = arith.constant 0 : i32
    return %c0_i32, %c0_i32_0 : i32, i32
  }
  func.func @transform_4(%arg0: i32) -> (i32, i32) {
    %c0_i32 = arith.constant 0 : i32
    %c0_i32_0 = arith.constant 0 : i32
    %c0_i32_1 = arith.constant 0 : i32
    return %c0_i32, %c0_i32_0 : i32, i32
  }
  func.func @transform_5(%arg0: i32) -> (i32, i32) {
    %c0_i32 = arith.constant 0 : i32
    %c0_i32_0 = arith.constant 0 : i32
    %c0_i32_1 = arith.constant 0 : i32
    return %c0_i32, %c0_i32_0 : i32, i32
  }
  func.func @transform_6(%arg0: i32) -> (i32, i32) {
    %c0_i32 = arith.constant 0 : i32
    %c0_i32_0 = arith.constant 0 : i32
    %c0_i32_1 = arith.constant 0 : i32
    return %c0_i32, %c0_i32_0 : i32, i32
  }
  func.func @transform_7(%arg0: i32) -> (i32, i32) {
    %c0_i32 = arith.constant 0 : i32
    %c0_i32_0 = arith.constant 0 : i32
    return %arg0, %c0_i32 : i32, i32
  }
  func.func @transform_8(%arg0: i32) -> (i32, i32) {
    %c0_i32 = arith.constant 0 : i32
    %c0_i32_0 = arith.constant 0 : i32
    return %arg0, %c0_i32 : i32, i32
  }
}

</mosaic_0001>

<llo_original>
// kernel: tpu_custom_call.1
$region0: #{tpu_custom_call.1}
  #allocation0 [shape = 'u32[]', space=smem, size = 0x4, offset = 0x4, fixed_abs, tag = 'smem constant byte address 0x4 - core index']
  #allocation1 [shape = 'u32[72,128]{1,0:T(1,128)}', space=vmem, size = 0x9000, scoped, tag = 'internal scratch']
  #allocation2 [shape = 'f32[8,256]{1,0:T(8,128)}', space=vmem, size = 0x2000, scoped, tag = 'scratch operand']
  %s0 = inlined_call_operand.hbm [shape: f32[8,128], index: 0, kind: input, shape index: {}]
  %s1 = inlined_call_operand.hbm [shape: f32[8,128], index: 1, kind: input, shape index: {}]
  %s2 = inlined_call_operand.hbm [shape: f32[8,128], index: 2, kind: input, shape index: {}]
  %s3 = inlined_call_operand.hbm [shape: f32[256,512], index: 3, kind: input, shape index: {}]
  %s4 = inlined_call_operand.hbm [shape: f32[1,512], index: 4, kind: input, shape index: {}]
  %s5 = inlined_call_operand.vmem [shape: f32[1,512], index: 5, kind: input, shape index: {}]
  %s6 = inlined_call_operand.hbm [shape: f32[1,512], index: 6, kind: input, shape index: {}]
  %s7 = inlined_call_operand.hbm [shape: f32[8,128], index: 7, kind: output, shape index: {0}]
  %s8 = inlined_call_operand.hbm [shape: f32[8,128], index: 8, kind: output, shape index: {1}]
  %9 = xla_tuple %s7, %s8
  %s10 = sld [smem:[#allocation0]]
  $region70: #{tpu_custom_call.1} parent=0
    _
  %s12 = ssub.s32 1, %s10
  %s13 = scalar_select 0, %s12, %s10
  $region1: #{tpu_custom_call.1} parent=0
    #allocation3 [shape = 'u8[4096]{0}', space=vmem, size = 0x1000, scoped, tag = 'input window, operand 0, single buffered']
    #allocation4 [shape = 's32[1]{0}', space=sflag, size = 0x4, scoped, tag = 'scoped memory for tpu_custom_call.1']
    #allocation5 [shape = 's32[1]{0}', space=sflag, size = 0x4, scoped, tag = 'scoped memory for tpu_custom_call.1']
    #allocation6 [shape = 'u8[4096]{0}', space=vmem, size = 0x1000, scoped, tag = 'input window, operand 1, single buffered']
    #allocation7 [shape = 's32[1]{0}', space=sflag, size = 0x4, scoped, tag = 'scoped memory for tpu_custom_call.1']
    #allocation8 [shape = 'u8[4096]{0}', space=vmem, size = 0x1000, scoped, tag = 'input window, operand 2, single buffered']
    #allocation9 [shape = 'u8[524288]{0}', space=vmem, size = 0x80000, scoped, tag = 'input window, operand 3, single buffered']
    #allocation10 [shape = 's32[1]{0}', space=sflag, size = 0x4, scoped, tag = 'scoped memory for tpu_custom_call.1']
    #allocation11 [shape = 'u8[2048]{0}', space=vmem, size = 0x800, scoped, tag = 'input window, operand 4, single buffered']
    #allocation12 [shape = 'u8[2048]{0}', space=vmem, size = 0x800, scoped, tag = 'input window, operand 6, single buffered']
    #allocation13 [shape = 's32[1]{0}', space=sflag, size = 0x4, scoped, tag = 'scoped memory for tpu_custom_call.1']
    #allocation14 [shape = 'u8[4096]{0}', space=vmem, size = 0x1000, scoped, tag = 'output window, operand 0, single buffered']
    #allocation15 [shape = 'u8[4096]{0}', space=vmem, size = 0x1000, scoped, tag = 'output window, operand 1, single buffered']
    #allocation16 [shape = 's32[1]{0}', space=sflag, size = 0x4, scoped, tag = 'scoped memory for tpu_custom_call.1']
    %14 = vsyncpa [#allocation4], 0
    %15 = vsyncpa [#allocation7], 0
    %16 = vsyncpa [#allocation10], 0
    %17 = vsyncpa [#allocation13], 0
    %18 = vsyncpa [#allocation5], 0
    %19 = vsyncpa [#allocation16], 0
    // Predicated region
    $region2: #{tpu_custom_call.1} parent=1 // pred_check
      _
    $region3: #{tpu_custom_call.1} parent=1 // pred_check_branch
      %21 = sbr.rel (0) target = $region5
    $region4: #{tpu_custom_call.1} parent=1 // pred_region
      %23 = vsyncadd [#allocation4], 0
      %s25 = sshll.u32 %s0, 4
      %s26 = int_to_ptr.hbm [resolvable:$true] %s25
      %s27 = sshll.u32 [#allocation3], 4
      %s28 = int_to_ptr.vmem [resolvable:$true] %s27
      %30 = dma.hbm_to_vmem [thread:$0]  %s26, 128, %s28, [#allocation4]
    $region5: #{tpu_custom_call.1} parent=1 // pred_fallthru
      _
    // Predicated region
    $region6: #{tpu_custom_call.1} parent=1 // pred_check
      _
    $region7: #{tpu_custom_call.1} parent=1 // pred_check_branch
      %32 = sbr.rel (0) target = $region9
    $region8: #{tpu_custom_call.1} parent=1 // pred_region
      %34 = vsyncadd [#allocation7], 0
      %s36 = sshll.u32 %s1, 4
      %s37 = int_to_ptr.hbm [resolvable:$true] %s36
      %s38 = sshll.u32 [#allocation6], 4
      %s39 = int_to_ptr.vmem [resolvable:$true] %s38
      %41 = dma.hbm_to_vmem [thread:$0]  %s37, 128, %s39, [#allocation7]
    $region9: #{tpu_custom_call.1} parent=1 // pred_fallthru
      _
    // Predicated region
    $region10: #{tpu_custom_call.1} parent=1 // pred_check
      _
    $region11: #{tpu_custom_call.1} parent=1 // pred_check_branch
      %43 = sbr.rel (0) target = $region13
    $region12: #{tpu_custom_call.1} parent=1 // pred_region
      %45 = vsyncadd [#allocation7], 0
      %s47 = sshll.u32 %s2, 4
      %s48 = int_to_ptr.hbm [resolvable:$true] %s47
      %s49 = sshll.u32 [#allocation8], 4
      %s50 = int_to_ptr.vmem [resolvable:$true] %s49
      %52 = dma.hbm_to_vmem [thread:$0]  %s48, 128, %s50, [#allocation7]
    $region13: #{tpu_custom_call.1} parent=1 // pred_fallthru
      _
    // Predicated region
    $region14: #{tpu_custom_call.1} parent=1 // pred_check
      _
    $region15: #{tpu_custom_call.1} parent=1 // pred_check_branch
      %54 = sbr.rel (0) target = $region17
    $region16: #{tpu_custom_call.1} parent=1 // pred_region
      %56 = vsyncadd [#allocation10], 0
      %s57 = sshll.u32 %s3, 4
      %s58 = int_to_ptr.hbm [resolvable:$true] %s57
      %s59 = sshll.u32 [#allocation9], 4
      %s60 = int_to_ptr.vmem [resolvable:$true] %s59
      %65 = dma.hbm_to_vmem [thread:$0]  %s58, 16384, %s60, [#allocation10], 512, 512, 32
    $region17: #{tpu_custom_call.1} parent=1 // pred_fallthru
      _
    // Predicated region
    $region18: #{tpu_custom_call.1} parent=1 // pred_check
      _
    $region19: #{tpu_custom_call.1} parent=1 // pred_check_branch
      %67 = sbr.rel (0) target = $region21
    $region20: #{tpu_custom_call.1} parent=1 // pred_region
      %69 = vsyncadd [#allocation10], 0
      %s71 = sshll.u32 %s4, 4
      %s72 = int_to_ptr.hbm [resolvable:$true] %s71
      %s73 = sshll.u32 [#allocation11], 4
      %s74 = int_to_ptr.vmem [resolvable:$true] %s73
      %76 = dma.hbm_to_vmem [thread:$0]  %s72, 64, %s74, [#allocation10]
    $region21: #{tpu_custom_call.1} parent=1 // pred_fallthru
      _
    // Predicated region
    $region22: #{tpu_custom_call.1} parent=1 // pred_check
      _
    $region23: #{tpu_custom_call.1} parent=1 // pred_check_branch
      %78 = sbr.rel (0) target = $region25
    $region24: #{tpu_custom_call.1} parent=1 // pred_region
      _
    $region25: #{tpu_custom_call.1} parent=1 // pred_fallthru
      _
    // Predicated region
    $region26: #{tpu_custom_call.1} parent=1 // pred_check
      _
    $region27: #{tpu_custom_call.1} parent=1 // pred_check_branch
      %80 = sbr.rel (0) target = $region29
    $region28: #{tpu_custom_call.1} parent=1 // pred_region
      %82 = vsyncadd [#allocation13], 0
      %s84 = sshll.u32 %s6, 4
      %s85 = int_to_ptr.hbm [resolvable:$true] %s84
      %s86 = sshll.u32 [#allocation12], 4
      %s87 = int_to_ptr.vmem [resolvable:$true] %s86
      %89 = dma.hbm_to_vmem [thread:$0]  %s85, 64, %s87, [#allocation13]
    $region29: #{tpu_custom_call.1} parent=1 // pred_fallthru
      _
    // Predicated region
    $region30: #{tpu_custom_call.1} parent=1 // pred_check
      _
    $region31: #{tpu_custom_call.1} parent=1 // pred_check_branch
      %91 = sbr.rel (0) target = $region33
    $region32: #{tpu_custom_call.1} parent=1 // pred_region
      %93 = dma.done [#allocation4], 128
    $region33: #{tpu_custom_call.1} parent=1 // pred_fallthru
      _
    // Predicated region
    $region34: #{tpu_custom_call.1} parent=1 // pred_check
      _
    $region35: #{tpu_custom_call.1} parent=1 // pred_check_branch
      %95 = sbr.rel (0) target = $region37
    $region36: #{tpu_custom_call.1} parent=1 // pred_region
      %97 = dma.done [#allocation7], 128
    $region37: #{tpu_custom_call.1} parent=1 // pred_fallthru
      _
    // Predicated region
    $region38: #{tpu_custom_call.1} parent=1 // pred_check
      _
    $region39: #{tpu_custom_call.1} parent=1 // pred_check_branch
      %99 = sbr.rel (0) target = $region41
    $region40: #{tpu_custom_call.1} parent=1 // pred_region
      %101 = dma.done [#allocation7], 128
    $region41: #{tpu_custom_call.1} parent=1 // pred_fallthru
      _
    // Predicated region
    $region42: #{tpu_custom_call.1} parent=1 // pred_check
      _
    $region43: #{tpu_custom_call.1} parent=1 // pred_check_branch
      %103 = sbr.rel (0) target = $region45
    $region44: #{tpu_custom_call.1} parent=1 // pred_region
      %105 = dma.done [#allocation10], 16384
    $region45: #{tpu_custom_call.1} parent=1 // pred_fallthru
      _
    // Predicated region
    $region46: #{tpu_custom_call.1} parent=1 // pred_check
      _
    $region47: #{tpu_custom_call.1} parent=1 // pred_check_branch
      %107 = sbr.rel (0) target = $region49
    $region48: #{tpu_custom_call.1} parent=1 // pred_region
      %109 = dma.done [#allocation10], 64
    $region49: #{tpu_custom_call.1} parent=1 // pred_fallthru
      _
    // Predicated region
    $region50: #{tpu_custom_call.1} parent=1 // pred_check
      _
    $region51: #{tpu_custom_call.1} parent=1 // pred_check_branch
      %111 = sbr.rel (0) target = $region53
    $region52: #{tpu_custom_call.1} parent=1 // pred_region
      %113 = dma.done [#allocation13], 64
    $region53: #{tpu_custom_call.1} parent=1 // pred_fallthru
      _
    %v114 = vld [vmem:[#allocation3] sm:$0xff]
    %115 = vst [vmem:[#allocation2] sm:$0xff] %v114
    %v116 = vld [vmem:[#allocation6] sm:$0xff]
    %117 = vst [vmem:[#allocation2 + $0x8] sm:$0xff] %v116
    %v118 = vld [vmem:[#allocation2] sm:$0xff]
    %v119 = vld [vmem:[#allocation2 + $0x8] sm:$0xff]
    %v120 = vld [vmem:[#allocation9] sm:$0xff]
    %v121 = vld [vmem:[#allocation9 + $0x8] sm:$0xff]
    %v122 = vld [vmem:[#allocation9 + $0x10] sm:$0xff]
    %v123 = vld [vmem:[#allocation9 + $0x18] sm:$0xff]
    %v124 = vld [vmem:[#allocation9 + $0x20] sm:$0xff]
    %v125 = vld [vmem:[#allocation9 + $0x28] sm:$0xff]
    %v126 = vld [vmem:[#allocation9 + $0x30] sm:$0xff]
    %v127 = vld [vmem:[#allocation9 + $0x38] sm:$0xff]
    %v128 = vld [vmem:[#allocation9 + $0x40] sm:$0xff]
    %v129 = vld [vmem:[#allocation9 + $0x48] sm:$0xff]
    %v130 = vld [vmem:[#allocation9 + $0x50] sm:$0xff]
    %v131 = vld [vmem:[#allocation9 + $0x58] sm:$0xff]
    %v132 = vld [vmem:[#allocation9 + $0x60] sm:$0xff]
    %v133 = vld [vmem:[#allocation9 + $0x68] sm:$0xff]
    %v134 = vld [vmem:[#allocation9 + $0x70] sm:$0xff]
    %v135 = vld [vmem:[#allocation9 + $0x78] sm:$0xff]
    %v136 = vld [vmem:[#allocation9 + $0x80] sm:$0xff]
    %v137 = vld [vmem:[#allocation9 + $0x88] sm:$0xff]
    %v138 = vld [vmem:[#allocation9 + $0x90] sm:$0xff]
    %v139 = vld [vmem:[#allocation9 + $0x98] sm:$0xff]
    %v140 = vld [vmem:[#allocation9 + $0xa0] sm:$0xff]
    %v141 = vld [vmem:[#allocation9 + $0xa8] sm:$0xff]
    %v142 = vld [vmem:[#allocation9 + $0xb0] sm:$0xff]
    %v143 = vld [vmem:[#allocation9 + $0xb8] sm:$0xff]
    %v144 = vld [vmem:[#allocation9 + $0xc0] sm:$0xff]
    %v145 = vld [vmem:[#allocation9 + $0xc8] sm:$0xff]
    %v146 = vld [vmem:[#allocation9 + $0xd0] sm:$0xff]
    %v147 = vld [vmem:[#allocation9 + $0xd8] sm:$0xff]
    %v148 = vld [vmem:[#allocation9 + $0xe0] sm:$0xff]
    %v149 = vld [vmem:[#allocation9 + $0xe8] sm:$0xff]
    %v150 = vld [vmem:[#allocation9 + $0xf0] sm:$0xff]
    %v151 = vld [vmem:[#allocation9 + $0xf8] sm:$0xff]
    %v152 = vld [vmem:[#allocation9 + $0x100] sm:$0xff]
    %v153 = vld [vmem:[#allocation9 + $0x108] sm:$0xff]
    %v154 = vld [vmem:[#allocation9 + $0x110] sm:$0xff]
    %v155 = vld [vmem:[#allocation9 + $0x118] sm:$0xff]
    %v156 = vld [vmem:[#allocation9 + $0x120] sm:$0xff]
    %v157 = vld [vmem:[#allocation9 + $0x128] sm:$0xff]
    %v158 = vld [vmem:[#allocation9 + $0x130] sm:$0xff]
    %v159 = vld [vmem:[#allocation9 + $0x138] sm:$0xff]
    %v160 = vld [vmem:[#allocation9 + $0x140] sm:$0xff]
    %v161 = vld [vmem:[#allocation9 + $0x148] sm:$0xff]
    %v162 = vld [vmem:[#allocation9 + $0x150] sm:$0xff]
    %v163 = vld [vmem:[#allocation9 + $0x158] sm:$0xff]
    %v164 = vld [vmem:[#allocation9 + $0x160] sm:$0xff]
    %v165 = vld [vmem:[#allocation9 + $0x168] sm:$0xff]
    %v166 = vld [vmem:[#allocation9 + $0x170] sm:$0xff]
    %v167 = vld [vmem:[#allocation9 + $0x178] sm:$0xff]
    %v168 = vld [vmem:[#allocation9 + $0x180] sm:$0xff]
    %v169 = vld [vmem:[#allocation9 + $0x188] sm:$0xff]
    %v170 = vld [vmem:[#allocation9 + $0x190] sm:$0xff]
    %v171 = vld [vmem:[#allocation9 + $0x198] sm:$0xff]
    %v172 = vld [vmem:[#allocation9 + $0x1a0] sm:$0xff]
    %v173 = vld [vmem:[#allocation9 + $0x1a8] sm:$0xff]
    %v174 = vld [vmem:[#allocation9 + $0x1b0] sm:$0xff]
    %v175 = vld [vmem:[#allocation9 + $0x1b8] sm:$0xff]
    %v176 = vld [vmem:[#allocation9 + $0x1c0] sm:$0xff]
    %v177 = vld [vmem:[#allocation9 + $0x1c8] sm:$0xff]
    %v178 = vld [vmem:[#allocation9 + $0x1d0] sm:$0xff]
    %v179 = vld [vmem:[#allocation9 + $0x1d8] sm:$0xff]
    %v180 = vld [vmem:[#allocation9 + $0x1e0] sm:$0xff]
    %v181 = vld [vmem:[#allocation9 + $0x1e8] sm:$0xff]
    %v182 = vld [vmem:[#allocation9 + $0x1f0] sm:$0xff]
    %v183 = vld [vmem:[#allocation9 + $0x1f8] sm:$0xff]
    %v184 = vld [vmem:[#allocation9 + $0x200] sm:$0xff]
    %v185 = vld [vmem:[#allocation9 + $0x208] sm:$0xff]
    %v186 = vld [vmem:[#allocation9 + $0x210] sm:$0xff]
    %v187 = vld [vmem:[#allocation9 + $0x218] sm:$0xff]
    %v188 = vld [vmem:[#allocation9 + $0x220] sm:$0xff]
    %v189 = vld [vmem:[#allocation9 + $0x228] sm:$0xff]
    %v190 = vld [vmem:[#allocation9 + $0x230] sm:$0xff]
    %v191 = vld [vmem:[#allocation9 + $0x238] sm:$0xff]
    %v192 = vld [vmem:[#allocation9 + $0x240] sm:$0xff]
    %v193 = vld [vmem:[#allocation9 + $0x248] sm:$0xff]
    %v194 = vld [vmem:[#allocation9 + $0x250] sm:$0xff]
    %v195 = vld [vmem:[#allocation9 + $0x258] sm:$0xff]
    %v196 = vld [vmem:[#allocation9 + $0x260] sm:$0xff]
    %v197 = vld [vmem:[#allocation9 + $0x268] sm:$0xff]
    %v198 = vld [vmem:[#allocation9 + $0x270] sm:$0xff]
    %v199 = vld [vmem:[#allocation9 + $0x278] sm:$0xff]
    %v200 = vld [vmem:[#allocation9 + $0x280] sm:$0xff]
    %v201 = vld [vmem:[#allocation9 + $0x288] sm:$0xff]
    %v202 = vld [vmem:[#allocation9 + $0x290] sm:$0xff]
    %v203 = vld [vmem:[#allocation9 + $0x298] sm:$0xff]
    %v204 = vld [vmem:[#allocation9 + $0x2a0] sm:$0xff]
    %v205 = vld [vmem:[#allocation9 + $0x2a8] sm:$0xff]
    %v206 = vld [vmem:[#allocation9 + $0x2b0] sm:$0xff]
    %v207 = vld [vmem:[#allocation9 + $0x2b8] sm:$0xff]
    %v208 = vld [vmem:[#allocation9 + $0x2c0] sm:$0xff]
    %v209 = vld [vmem:[#allocation9 + $0x2c8] sm:$0xff]
    %v210 = vld [vmem:[#allocation9 + $0x2d0] sm:$0xff]
    %v211 = vld [vmem:[#allocation9 + $0x2d8] sm:$0xff]
    %v212 = vld [vmem:[#allocation9 + $0x2e0] sm:$0xff]
    %v213 = vld [vmem:[#allocation9 + $0x2e8] sm:$0xff]
    %v214 = vld [vmem:[#allocation9 + $0x2f0] sm:$0xff]
    %v215 = vld [vmem:[#allocation9 + $0x2f8] sm:$0xff]
    %v216 = vld [vmem:[#allocation9 + $0x300] sm:$0xff]
    %v217 = vld [vmem:[#allocation9 + $0x308] sm:$0xff]
    %v218 = vld [vmem:[#allocation9 + $0x310] sm:$0xff]
    %v219 = vld [vmem:[#allocation9 + $0x318] sm:$0xff]
    %v220 = vld [vmem:[#allocation9 + $0x320] sm:$0xff]
    %v221 = vld [vmem:[#allocation9 + $0x328] sm:$0xff]
    %v222 = vld [vmem:[#allocation9 + $0x330] sm:$0xff]
    %v223 = vld [vmem:[#allocation9 + $0x338] sm:$0xff]
    %v224 = vld [vmem:[#allocation9 + $0x340] sm:$0xff]
    %v225 = vld [vmem:[#allocation9 + $0x348] sm:$0xff]
    %v226 = vld [vmem:[#allocation9 + $0x350] sm:$0xff]
    %v227 = vld [vmem:[#allocation9 + $0x358] sm:$0xff]
    %v228 = vld [vmem:[#allocation9 + $0x360] sm:$0xff]
    %v229 = vld [vmem:[#allocation9 + $0x368] sm:$0xff]
    %v230 = vld [vmem:[#allocation9 + $0x370] sm:$0xff]
    %v231 = vld [vmem:[#allocation9 + $0x378] sm:$0xff]
    %v232 = vld [vmem:[#allocation9 + $0x380] sm:$0xff]
    %v233 = vld [vmem:[#allocation9 + $0x388] sm:$0xff]
    %v234 = vld [vmem:[#allocation9 + $0x390] sm:$0xff]
    %v235 = vld [vmem:[#allocation9 + $0x398] sm:$0xff]
    %v236 = vld [vmem:[#allocation9 + $0x3a0] sm:$0xff]
    %v237 = vld [vmem:[#allocation9 + $0x3a8] sm:$0xff]
    %v238 = vld [vmem:[#allocation9 + $0x3b0] sm:$0xff]
    %v239 = vld [vmem:[#allocation9 + $0x3b8] sm:$0xff]
    %v240 = vld [vmem:[#allocation9 + $0x3c0] sm:$0xff]
    %v241 = vld [vmem:[#allocation9 + $0x3c8] sm:$0xff]
    %v242 = vld [vmem:[#allocation9 + $0x3d0] sm:$0xff]
    %v243 = vld [vmem:[#allocation9 + $0x3d8] sm:$0xff]
    %v244 = vld [vmem:[#allocation9 + $0x3e0] sm:$0xff]
    %v245 = vld [vmem:[#allocation9 + $0x3e8] sm:$0xff]
    %v246 = vld [vmem:[#allocation9 + $0x3f0] sm:$0xff]
    %v247 = vld [vmem:[#allocation9 + $0x3f8] sm:$0xff]
    %v248 = vld [vmem:[#allocation11] sm:$0xf]
    %v250 = vperm.slane %v248, 0
    %v251 = vperm.slane %v248, 1
    %v252 = vperm.slane %v248, 2
    %v253 = vperm.slane %v248, 3
    %258 = vmatpush.msra.mxu0 %v180
    %259 = vmatpush.msra.mxu0 %v176
    %260 = vmatpush.msra.mxu0 %v172
    %261 = vmatpush.msra.mxu0 %v168
    %262 = vmatpush.msra.mxu0 %v164
    %263 = vmatpush.msra.mxu0 %v160
    %264 = vmatpush.msra.mxu0 %v156
    %265 = vmatpush.msra.mxu0 %v152
    %266 = vmatpush.msra.mxu0 %v148
    %267 = vmatpush.msra.mxu0 %v144
    %268 = vmatpush.msra.mxu0 %v140
    %269 = vmatpush.msra.mxu0 %v136
    %270 = vmatpush.msra.mxu0 %v132
    %271 = vmatpush.msra.mxu0 %v128
    %272 = vmatpush.msra.mxu0 %v124
    %273 = vmatpush.msra.mxu0 %v120
    %274 = vmatmul.f32.gmra.mxu0 %v118
    %v275 = vpop.f32.mrf.mxu0
    %v276 = vadd.f32 %v250, %v275
    %277 = vdwg.mxu0
    %278 = vmatpush.msra.mxu0 %v244
    %279 = vmatpush.msra.mxu0 %v240
    %280 = vmatpush.msra.mxu0 %v236
    %281 = vmatpush.msra.mxu0 %v232
    %282 = vmatpush.msra.mxu0 %v228
    %283 = vmatpush.msra.mxu0 %v224
    %284 = vmatpush.msra.mxu0 %v220
    %285 = vmatpush.msra.mxu0 %v216
    %286 = vmatpush.msra.mxu0 %v212
    %287 = vmatpush.msra.mxu0 %v208
    %288 = vmatpush.msra.mxu0 %v204
    %289 = vmatpush.msra.mxu0 %v200
    %290 = vmatpush.msra.mxu0 %v196
    %291 = vmatpush.msra.mxu0 %v192
    %292 = vmatpush.msra.mxu0 %v188
    %293 = vmatpush.msra.mxu0 %v184
    %294 = vmatmul.f32.gmra.mxu0 %v119
    %v295 = vpop.f32.mrf.mxu0
    %v296 = vadd.f32 %v276, %v295
    %297 = vdwg.mxu0
    %298 = vmatpush.msra.mxu0 %v181
    %299 = vmatpush.msra.mxu0 %v177
    %300 = vmatpush.msra.mxu0 %v173
    %301 = vmatpush.msra.mxu0 %v169
    %302 = vmatpush.msra.mxu0 %v165
    %303 = vmatpush.msra.mxu0 %v161
    %304 = vmatpush.msra.mxu0 %v157
    %305 = vmatpush.msra.mxu0 %v153
    %306 = vmatpush.msra.mxu0 %v149
    %307 = vmatpush.msra.mxu0 %v145
    %308 = vmatpush.msra.mxu0 %v141
    %309 = vmatpush.msra.mxu0 %v137
    %310 = vmatpush.msra.mxu0 %v133
    %311 = vmatpush.msra.mxu0 %v129
    %312 = vmatpush.msra.mxu0 %v125
    %313 = vmatpush.msra.mxu0 %v121
    %314 = vmatmul.f32.gmra.mxu0 %v118
    %v315 = vpop.f32.mrf.mxu0
    %v316 = vadd.f32 %v251, %v315
    %317 = vdwg.mxu0
    %318 = vmatpush.msra.mxu0 %v245
    %319 = vmatpush.msra.mxu0 %v241
    %320 = vmatpush.msra.mxu0 %v237
    %321 = vmatpush.msra.mxu0 %v233
    %322 = vmatpush.msra.mxu0 %v229
    %323 = vmatpush.msra.mxu0 %v225
    %324 = vmatpush.msra.mxu0 %v221
    %325 = vmatpush.msra.mxu0 %v217
    %326 = vmatpush.msra.mxu0 %v213
    %327 = vmatpush.msra.mxu0 %v209
    %328 = vmatpush.msra.mxu0 %v205
    %329 = vmatpush.msra.mxu0 %v201
    %330 = vmatpush.msra.mxu0 %v197
    %331 = vmatpush.msra.mxu0 %v193
    %332 = vmatpush.msra.mxu0 %v189
    %333 = vmatpush.msra.mxu0 %v185
    %334 = vmatmul.f32.gmra.mxu0 %v119
    %v335 = vpop.f32.mrf.mxu0
    %v336 = vadd.f32 %v316, %v335
    %337 = vdwg.mxu0
    %338 = vmatpush.msra.mxu0 %v182
    %339 = vmatpush.msra.mxu0 %v178
    %340 = vmatpush.msra.mxu0 %v174
    %341 = vmatpush.msra.mxu0 %v170
    %342 = vmatpush.msra.mxu0 %v166
    %343 = vmatpush.msra.mxu0 %v162
    %344 = vmatpush.msra.mxu0 %v158
    %345 = vmatpush.msra.mxu0 %v154
    %346 = vmatpush.msra.mxu0 %v150
    %347 = vmatpush.msra.mxu0 %v146
    %348 = vmatpush.msra.mxu0 %v142
    %349 = vmatpush.msra.mxu0 %v138
    %350 = vmatpush.msra.mxu0 %v134
    %351 = vmatpush.msra.mxu0 %v130
    %352 = vmatpush.msra.mxu0 %v126
    %353 = vmatpush.msra.mxu0 %v122
    %354 = vmatmul.f32.gmra.mxu0 %v118
    %v355 = vpop.f32.mrf.mxu0
    %v356 = vadd.f32 %v252, %v355
    %357 = vdwg.mxu0
    %358 = vmatpush.msra.mxu0 %v246
    %359 = vmatpush.msra.mxu0 %v242
    %360 = vmatpush.msra.mxu0 %v238
    %361 = vmatpush.msra.mxu0 %v234
    %362 = vmatpush.msra.mxu0 %v230
    %363 = vmatpush.msra.mxu0 %v226
    %364 = vmatpush.msra.mxu0 %v222
    %365 = vmatpush.msra.mxu0 %v218
    %366 = vmatpush.msra.mxu0 %v214
    %367 = vmatpush.msra.mxu0 %v210
    %368 = vmatpush.msra.mxu0 %v206
    %369 = vmatpush.msra.mxu0 %v202
    %370 = vmatpush.msra.mxu0 %v198
    %371 = vmatpush.msra.mxu0 %v194
    %372 = vmatpush.msra.mxu0 %v190
    %373 = vmatpush.msra.mxu0 %v186
    %374 = vmatmul.f32.gmra.mxu0 %v119
    %v375 = vpop.f32.mrf.mxu0
    %v376 = vadd.f32 %v356, %v375
    %377 = vdwg.mxu0
    %378 = vmatpush.msra.mxu0 %v183
    %379 = vmatpush.msra.mxu0 %v179
    %380 = vmatpush.msra.mxu0 %v175
    %381 = vmatpush.msra.mxu0 %v171
    %382 = vmatpush.msra.mxu0 %v167
    %383 = vmatpush.msra.mxu0 %v163
    %384 = vmatpush.msra.mxu0 %v159
    %385 = vmatpush.msra.mxu0 %v155
    %386 = vmatpush.msra.mxu0 %v151
    %387 = vmatpush.msra.mxu0 %v147
    %388 = vmatpush.msra.mxu0 %v143
    %389 = vmatpush.msra.mxu0 %v139
    %390 = vmatpush.msra.mxu0 %v135
    %391 = vmatpush.msra.mxu0 %v131
    %392 = vmatpush.msra.mxu0 %v127
    %393 = vmatpush.msra.mxu0 %v123
    %394 = vmatmul.f32.gmra.mxu0 %v118
    %v395 = vpop.f32.mrf.mxu0
    %v396 = vadd.f32 %v253, %v395
    %397 = vdwg.mxu0
    %398 = vmatpush.msra.mxu0 %v247
    %399 = vmatpush.msra.mxu0 %v243
    %400 = vmatpush.msra.mxu0 %v239
    %401 = vmatpush.msra.mxu0 %v235
    %402 = vmatpush.msra.mxu0 %v231
    %403 = vmatpush.msra.mxu0 %v227
    %404 = vmatpush.msra.mxu0 %v223
    %405 = vmatpush.msra.mxu0 %v219
    %406 = vmatpush.msra.mxu0 %v215
    %407 = vmatpush.msra.mxu0 %v211
    %408 = vmatpush.msra.mxu0 %v207
    %409 = vmatpush.msra.mxu0 %v203
    %410 = vmatpush.msra.mxu0 %v199
    %411 = vmatpush.msra.mxu0 %v195
    %412 = vmatpush.msra.mxu0 %v191
    %413 = vmatpush.msra.mxu0 %v187
    %414 = vmatmul.f32.gmra.mxu0 %v119
    %v415 = vpop.f32.mrf.mxu0
    %v416 = vadd.f32 %v396, %v415
    %417 = vdwg.mxu0
    %v418 = vld [vmem:[#allocation8] sm:$0xff]
    %v419 = vmul.f32 %v296, 0.5
    %v420 = vtanh.pop %v419
    %v421 = vmul.f32 %v420, 0.5
    %v422 = vadd.f32 %v421, 0.5
    %v423 = vmul.f32 %v336, 0.5
    %v424 = vtanh.pop %v423
    %v425 = vmul.f32 %v424, 0.5
    %v426 = vadd.f32 %v425, 0.5
    %v427 = vtanh.pop %v376
    %v428 = vmul.f32 %v416, 0.5
    %v429 = vtanh.pop %v428
    %v430 = vmul.f32 %v429, 0.5
    %v431 = vadd.f32 %v430, 0.5
    %v432 = vmul.f32 %v426, %v418
    %v433 = vmul.f32 %v422, %v427
    %v434 = vadd.f32 %v432, %v433
    %v435 = vtanh.pop %v434
    %v436 = vmul.f32 %v431, %v435
    %437 = vst [vmem:[#allocation14] sm:$0xff] %v436
    %438 = vst [vmem:[#allocation15] sm:$0xff] %v434
    // Predicated region
    $region54: #{tpu_custom_call.1} parent=1 // pred_check
      _
    $region55: #{tpu_custom_call.1} parent=1 // pred_check_branch
      %440 = sbr.rel (0) target = $region57
    $region56: #{tpu_custom_call.1} parent=1 // pred_region
      %442 = vsyncadd [#allocation5], 0
      %s444 = sshll.u32 [#allocation14], 4
      %s445 = int_to_ptr.vmem [resolvable:$true] %s444
      %s446 = sshll.u32 %s7, 4
      %s447 = int_to_ptr.hbm [resolvable:$true] %s446
      %449 = dma.vmem_to_hbm [thread:$0]  %s445, 128, %s447, [#allocation5]
    $region57: #{tpu_custom_call.1} parent=1 // pred_fallthru
      _
    // Predicated region
    $region58: #{tpu_custom_call.1} parent=1 // pred_check
      _
    $region59: #{tpu_custom_call.1} parent=1 // pred_check_branch
      %451 = sbr.rel (0) target = $region61
    $region60: #{tpu_custom_call.1} parent=1 // pred_region
      %453 = vsyncadd [#allocation16], 0
      %s455 = sshll.u32 [#allocation15], 4
      %s456 = int_to_ptr.vmem [resolvable:$true] %s455
      %s457 = sshll.u32 %s8, 4
      %s458 = int_to_ptr.hbm [resolvable:$true] %s457
      %460 = dma.vmem_to_hbm [thread:$0]  %s456, 128, %s458, [#allocation16]
    $region61: #{tpu_custom_call.1} parent=1 // pred_fallthru
      _
    // Predicated region
    $region62: #{tpu_custom_call.1} parent=1 // pred_check
      _
    $region63: #{tpu_custom_call.1} parent=1 // pred_check_branch
      %462 = sbr.rel (0) target = $region65
    $region64: #{tpu_custom_call.1} parent=1 // pred_region
      %464 = dma.done [#allocation5], 128
    $region65: #{tpu_custom_call.1} parent=1 // pred_fallthru
      _
    // Predicated region
    $region66: #{tpu_custom_call.1} parent=1 // pred_check
      _
    $region67: #{tpu_custom_call.1} parent=1 // pred_check_branch
      %466 = sbr.rel (0) target = $region69
    $region68: #{tpu_custom_call.1} parent=1 // pred_region
      %468 = dma.done [#allocation16], 128
    $region69: #{tpu_custom_call.1} parent=1 // pred_fallthru
      _
    %469 = vsyncpa [#allocation4], 1
    %470 = vsyncpa [#allocation7], 1
    %471 = vsyncpa [#allocation10], 1
    %472 = vsyncpa [#allocation13], 1
    %473 = vsyncpa [#allocation5], 1
    %474 = vsyncpa [#allocation16], 1

</llo_original>
